<compile_context>
chip_gen: v7x
topology: tpu7x:2x2x1
jax: 0.10.0
libtpu: 0.0.40
codegen_flags: <defaults>
</compile_context>

<pallas_src>
import functools

import jax
import jax.numpy as jnp
from jax.experimental import pallas as pl
from jax.experimental.pallas import tpu as pltpu

_LANE = 128
_SUB = 8
_DEFAULT_MAX_TILE_ROWS = 8192  # 8192 * 128 * 4B = 4 MiB per input per buffer


def _round_up(x, m):
    return ((x + m - 1) // m) * m


def _vmem_capacity_bytes():
    try:
        return int(pltpu.get_tpu_info().vmem_capacity_bytes)
    except Exception:
        return 64 * 1024 * 1024  # conservative (v7x-sized) fallback


def _num_tensorcores():
    # v7x packs 2 TensorCores per device; v5e/v6e have 1.  Default to 1 so the
    # shard axis only kicks in where it can help.
    try:
        kind = jax.devices()[0].device_kind.lower()
    except Exception:
        return 1
    return 2 if ("v7" in kind or "tpu7" in kind) else 1


def _mse_partial_kernel(pred_ref, real_ref, o_ref, *, tile_rows, rows_valid,
                        total_blocks, num_shards, need_mask, lane_aligned):
    p = pl.program_id(0)   # shard axis ("parallel")
    i = pl.program_id(1)   # row-block within the shard ("arbitrary")

    @pl.when(i == 0)
    def _init():
        o_ref[...] = jnp.zeros_like(o_ref)

    d = real_ref[...].astype(jnp.float32) - pred_ref[...].astype(jnp.float32)
    sq = d * d
    cols = sq.shape[-1]

    def _accum(vals):
        if lane_aligned:
            # (tile_rows, 128) -> (tile_rows//8, 8, 128); summing the leading
            # axis is pure VPU vreg adds into the resident (8, 128) slab.
            o_ref[...] = o_ref[...] + jnp.sum(
                vals.reshape(tile_rows // _SUB, _SUB, cols), axis=0)
        else:
            # General last dim (block spans the full width): column-sum the
            # tile (VPU adds + one tiny sublane combine) into row 0 of the
            # slab; rows 1..7 stay zero and are harmless in the final reduce.
            o_ref[0:1, :] = o_ref[0:1, :] + jnp.sum(vals, axis=0, keepdims=True)

    if need_mask:
        # Only the globally-last row block can be ragged; gate the mask there
        # so every full tile skips the iota/compare/select entirely.
        is_ragged = jnp.logical_and(p == num_shards - 1,
                                    i == pl.num_programs(1) - 1)
        valid_in_last = rows_valid - (total_blocks - 1) * tile_rows  # static
        row_mask = (jax.lax.broadcasted_iota(jnp.int32, (tile_rows, 1), 0)
                    < valid_in_last)

        @pl.when(jnp.logical_not(is_ragged))
        def _full():
            _accum(sq)

        @pl.when(is_ragged)
        def _last():
            # jnp.where discards any garbage (inf/NaN) read from the OOB rows.
            _accum(jnp.where(row_mask, sq, 0.0))
    else:
        _accum(sq)


def mse_pallas(pred, real, *, max_tile_rows=None):
    assert pred.shape == real.shape, "pred/real must have identical shapes"
    n = int(pred.size)

    # Fold to 2-D without any copy (pure reshapes of contiguous arrays):
    #  - if n is lane-aligned, use the optimal (n//128, 128) layout;
    #  - otherwise stream in the natural (rows, last_dim) shape with a
    #    full-width block (no wrapper-side prefix slice => no hidden HBM copy).
    if n % _LANE == 0:
        cols, lane_aligned = _LANE, True
    else:
        cols = int(pred.shape[-1]) if pred.ndim > 0 else 1
        lane_aligned = False
    rows = n // cols
    p2 = pred.reshape(rows, cols)
    r2 = real.reshape(rows, cols)

    # --- Tile sizing (generation-aware) -----------------------------------
    vmem_cap = _vmem_capacity_bytes()
    budget = min(vmem_cap // 3, 40 << 20)          # 2 inputs x 2 buffers
    row_bytes = _round_up(cols, _LANE) * p2.dtype.itemsize
    cap = _DEFAULT_MAX_TILE_ROWS if max_tile_rows is None else int(max_tile_rows)
    tile_rows = min(budget // (4 * row_bytes), cap, _round_up(rows, _SUB))
    tile_rows = max(_SUB, (tile_rows // _SUB) * _SUB)

    total_blocks = pl.cdiv(rows, tile_rows)
    need_mask = (rows % tile_rows) != 0

    # --- Optional 2-TensorCore sharding (v7x) ------------------------------
    num_cores = _num_tensorcores()
    if (num_cores > 1 and total_blocks >= num_cores
            and total_blocks % num_cores == 0):
        num_shards = num_cores
    else:
        num_shards = 1
    steps = total_blocks // num_shards

    working = 4 * tile_rows * row_bytes            # double-buffered inputs
    vmem_limit = int(min(vmem_cap * 3 // 4,
                         max(working + (16 << 20), 32 << 20)))

    kernel = functools.partial(
        _mse_partial_kernel,
        tile_rows=tile_rows,
        rows_valid=rows,
        total_blocks=total_blocks,
        num_shards=num_shards,
        need_mask=need_mask,
        lane_aligned=lane_aligned,
    )

    in_map = lambda p, i: (p * steps + i, 0)
    partials = pl.pallas_call(
        kernel,
        out_shape=jax.ShapeDtypeStruct((num_shards * _SUB, cols), jnp.float32),
        grid_spec=pltpu.PrefetchScalarGridSpec(
            num_scalar_prefetch=0,
            grid=(num_shards, steps),
            in_specs=[
                pl.BlockSpec((tile_rows, cols), in_map),
                pl.BlockSpec((tile_rows, cols), in_map),
            ],
            # Per-shard resident (8, cols) accumulator (same block across i).
            out_specs=pl.BlockSpec((_SUB, cols), lambda p, i: (p, 0)),
        ),
        compiler_params=pltpu.CompilerParams(
            dimension_semantics=("parallel", "arbitrary"),
            vmem_limit_bytes=vmem_limit,
        ),
    )(p2, r2)

    # Tiny final reduce + divide on the (num_shards*8, cols) partials.
    return jnp.sum(partials) / n


if __name__ == "__main__":
    key = jax.random.PRNGKey(0)

    def _check(shape, k, rtol, **kw):
        k1, k2 = jax.random.split(k)
        pred = jax.random.normal(k1, shape, dtype=jnp.float32)
        real = jax.random.normal(k2, shape, dtype=jnp.float32)
        got = jax.block_until_ready(mse_pallas(pred, real, **kw))
        ref = jnp.mean((real - pred) ** 2)
        assert jnp.allclose(got, ref, rtol=rtol, atol=1e-6), (shape, got, ref)

    keys = jax.random.split(key, 3)
    # Small NCHW-like tensor: single block, lane-aligned (n % 128 == 0) path.
    _check((2, 4, 16, 16), keys[0], rtol=1e-5)
    # AVmodel-like (batch, seq, 512) activations; tile forced small so the
    # multi-step resident-accumulator path is exercised.
    _check((2, 8, 512), keys[1], rtol=1e-5, max_tile_rows=16)
    # Non-multiple-of-128 size: streamed directly as (2080, 130) with no
    # wrapper-side copy; multi-step grid with the ragged last block masked.
    _check((4, 520, 130), keys[2], rtol=1e-4, max_tile_rows=256)

    print("KERNEL_OK")
</pallas_src>

<mosaic_0001>
module attributes {stable_mosaic.version = 11 : i64} {
  func.func @_mse_partial_kernel(%arg0: i32, %arg1: i32, %arg2: memref<16x128xf32, #tpu.memory_space<vmem>>, %arg3: memref<16x128xf32, #tpu.memory_space<vmem>>, %arg4: memref<8x128xf32, #tpu.memory_space<vmem>>) attributes {dimension_semantics = [#tpu.dimension_semantics<parallel>, #tpu.dimension_semantics<arbitrary>], iteration_bounds = array<i64: 1, 1>, scalar_prefetch = 0 : i64, scratch_operands = 0 : i64, tpu.core_type = #tpu.core_type<tc>, window_params = [{transform_indices = @transform_0, window_bounds = array<i64: 16, 128>}, {transform_indices = @transform_1, window_bounds = array<i64: 16, 128>}, {transform_indices = @transform_2, window_bounds = array<i64: 8, 128>}]} {
    %c0_i32 = arith.constant 0 : i32
    %0 = arith.cmpi eq, %arg1, %c0_i32 : i32
    %1 = arith.extui %0 : i1 to i32
    %c0_i32_0 = arith.constant 0 : i32
    %2 = arith.cmpi ne, %1, %c0_i32_0 : i32
    scf.if %2 {
      %cst_8 = arith.constant 0.000000e+00 : f32
      %12 = vector.broadcast %cst_8 : f32 to vector<8x128xf32>
      %c0_9 = arith.constant 0 : index
      %c0_10 = arith.constant 0 : index
      %13 = vector.load %arg4[%c0_9, %c0_10] : memref<8x128xf32, #tpu.memory_space<vmem>>, vector<8x128xf32>
      tpu.vector_store %arg4[%c0_9, %c0_10], %12 {strides = array<i32>} : memref<8x128xf32, #tpu.memory_space<vmem>>, vector<8x128xf32>,
    } else {
    }
    %c0 = arith.constant 0 : index
    %c0_1 = arith.constant 0 : index
    %3 = vector.load %arg3[%c0, %c0_1] : memref<16x128xf32, #tpu.memory_space<vmem>>, vector<16x128xf32>
    %c0_2 = arith.constant 0 : index
    %c0_3 = arith.constant 0 : index
    %4 = vector.load %arg2[%c0_2, %c0_3] : memref<16x128xf32, #tpu.memory_space<vmem>>, vector<16x128xf32>
    %5 = arith.subf %3, %4 : vector<16x128xf32>
    %6 = arith.mulf %5, %5 : vector<16x128xf32>
    %c0_4 = arith.constant 0 : index
    %c0_5 = arith.constant 0 : index
    %7 = vector.load %arg4[%c0_4, %c0_5] : memref<8x128xf32, #tpu.memory_space<vmem>>, vector<8x128xf32>
    %8 = vector.shape_cast %6 : vector<16x128xf32> to vector<2x8x128xf32>
    %cst = arith.constant dense<0.000000e+00> : vector<8x128xf32>
    %9 = vector.multi_reduction <add>, %8, %cst [0] : vector<2x8x128xf32> to vector<8x128xf32>
    %10 = arith.addf %7, %9 : vector<8x128xf32>
    %c0_6 = arith.constant 0 : index
    %c0_7 = arith.constant 0 : index
    %11 = vector.load %arg4[%c0_6, %c0_7] : memref<8x128xf32, #tpu.memory_space<vmem>>, vector<8x128xf32>
    tpu.vector_store %arg4[%c0_6, %c0_7], %10 {strides = array<i32>} : memref<8x128xf32, #tpu.memory_space<vmem>>, vector<8x128xf32>,
    return
  }
  func.func @transform_0(%arg0: i32, %arg1: i32) -> (i32, i32) {
    %c1_i32 = arith.constant 1 : i32
    %0 = arith.muli %arg0, %c1_i32 : i32
    %1 = arith.addi %0, %arg1 : i32
    %c0_i32 = arith.constant 0 : i32
    %c0_i32_0 = arith.constant 0 : i32
    return %1, %c0_i32 : i32, i32
  }
  func.func @transform_1(%arg0: i32, %arg1: i32) -> (i32, i32) {
    %c1_i32 = arith.constant 1 : i32
    %0 = arith.muli %arg0, %c1_i32 : i32
    %1 = arith.addi %0, %arg1 : i32
    %c0_i32 = arith.constant 0 : i32
    %c0_i32_0 = arith.constant 0 : i32
    return %1, %c0_i32 : i32, i32
  }
  func.func @transform_2(%arg0: i32, %arg1: i32) -> (i32, i32) {
    %c0_i32 = arith.constant 0 : i32
    %c0_i32_0 = arith.constant 0 : i32
    return %arg0, %c0_i32 : i32, i32
  }
}

</mosaic_0001>

<llo_original>
// kernel: tpu_custom_call.1
$region0: #{tpu_custom_call.1}
  #allocation0 [shape = 'u32[]', space=smem, size = 0x4, offset = 0x4, fixed_abs, tag = 'smem constant byte address 0x4 - core index']
  #allocation1 [shape = 'u32[144,128]{1,0:T(1,128)}', space=vmem, size = 0x12000, scoped, tag = 'internal scratch']
  %s0 = inlined_call_operand.hbm [shape: f32[16,128], index: 0, kind: input, shape index: {}]
  %s1 = inlined_call_operand.hbm [shape: f32[16,128], index: 1, kind: input, shape index: {}]
  %s2 = inlined_call_operand.hbm [shape: f32[8,128], index: 2, kind: output, shape index: {}]
  %s3 = sld [smem:[#allocation0]]
  $region30: #{tpu_custom_call.1} parent=0
    _
  %s5 = ssub.s32 1, %s3
  %s6 = scalar_select 0, %s5, %s3
  $region1: #{tpu_custom_call.1} parent=0
    #allocation2 [shape = 'u8[8192]{0}', space=vmem, size = 0x2000, scoped, tag = 'input window, operand 0, single buffered']
    #allocation3 [shape = 's32[1]{0}', space=sflag, size = 0x4, scoped, tag = 'scoped memory for tpu_custom_call.1']
    #allocation4 [shape = 's32[1]{0}', space=sflag, size = 0x4, scoped, tag = 'scoped memory for tpu_custom_call.1']
    #allocation5 [shape = 'u8[8192]{0}', space=vmem, size = 0x2000, scoped, tag = 'input window, operand 1, single buffered']
    #allocation6 [shape = 's32[1]{0}', space=sflag, size = 0x4, scoped, tag = 'scoped memory for tpu_custom_call.1']
    #allocation7 [shape = 'u8[4096]{0}', space=vmem, size = 0x1000, scoped, tag = 'output window, operand 0, single buffered']
    %7 = vsyncpa [#allocation3], 0
    %8 = vsyncpa [#allocation6], 0
    %9 = vsyncpa [#allocation4], 0
    // Predicated region
    $region2: #{tpu_custom_call.1} parent=1 // pred_check
      _
    $region3: #{tpu_custom_call.1} parent=1 // pred_check_branch
      %11 = sbr.rel (0) target = $region5
    $region4: #{tpu_custom_call.1} parent=1 // pred_region
      %s12 = sadd.s32 0, 0
      %s13 = smul.u32 2, %s12
      %s15 = ssub.s32 256, 256
      %16 = vsyncadd [#allocation3], %s15
      %s17 = smul.addr %s13, 128
      %s18 = scalar_lea.hbm %s0, %s17
      %s19 = sshll.u32 [#allocation2], 4
      %s20 = int_to_ptr.vmem [resolvable:$true] %s19
      %25 = dma.hbm_to_vmem [thread:$0]  %s18, 256, %s20, [#allocation3], 128, 128, 8
    $region5: #{tpu_custom_call.1} parent=1 // pred_fallthru
      _
    // Predicated region
    $region6: #{tpu_custom_call.1} parent=1 // pred_check
      _
    $region7: #{tpu_custom_call.1} parent=1 // pred_check_branch
      %27 = sbr.rel (0) target = $region9
    $region8: #{tpu_custom_call.1} parent=1 // pred_region
      %s28 = sadd.s32 0, 0
      %s29 = smul.u32 2, %s28
      %s31 = ssub.s32 256, 256
      %32 = vsyncadd [#allocation6], %s31
      %s33 = smul.addr %s29, 128
      %s34 = scalar_lea.hbm %s1, %s33
      %s35 = sshll.u32 [#allocation5], 4
      %s36 = int_to_ptr.vmem [resolvable:$true] %s35
      %41 = dma.hbm_to_vmem [thread:$0]  %s34, 256, %s36, [#allocation6], 128, 128, 8
    $region9: #{tpu_custom_call.1} parent=1 // pred_fallthru
      _
    // Predicated region
    $region10: #{tpu_custom_call.1} parent=1 // pred_check
      _
    $region11: #{tpu_custom_call.1} parent=1 // pred_check_branch
      %43 = sbr.rel (0) target = $region13
    $region12: #{tpu_custom_call.1} parent=1 // pred_region
      %44 = dma.done [#allocation3], 256
    $region13: #{tpu_custom_call.1} parent=1 // pred_fallthru
      _
    // Predicated region
    $region14: #{tpu_custom_call.1} parent=1 // pred_check
      _
    $region15: #{tpu_custom_call.1} parent=1 // pred_check_branch
      %46 = sbr.rel (0) target = $region17
    $region16: #{tpu_custom_call.1} parent=1 // pred_region
      %47 = dma.done [#allocation6], 256
    $region17: #{tpu_custom_call.1} parent=1 // pred_fallthru
      _
    %s48 = sadd.s32 0, 0
    %s49 = smul.u32 2, %s48
    %s50 = sadd.s32 0, 0
    %s51 = smul.u32 2, %s50
    %p52 = scmp.eq.s32.totalorder 0, 0
    // Predicated region
    $region18: #{tpu_custom_call.1} parent=1 // pred_check
      %p53 = pneg %p52
    $region19: #{tpu_custom_call.1} parent=1 // pred_check_branch
      %55 = sbr.rel (%p53) target = $region21
    $region20: #{tpu_custom_call.1} parent=1 // pred_region
      %56 = vst [vmem:[#allocation7] sm:$0xff] 0.0
    $region21: #{tpu_custom_call.1} parent=1 // pred_fallthru
      _
    %v57 = vld [vmem:[#allocation5] sm:$0xff]
    %v58 = vld [vmem:[#allocation5 + $0x8] sm:$0xff]
    %v59 = vld [vmem:[#allocation2] sm:$0xff]
    %v60 = vld [vmem:[#allocation2 + $0x8] sm:$0xff]
    %v61 = vsub.f32 %v57, %v59
    %v62 = vsub.f32 %v58, %v60
    %v63 = vmul.f32 %v61, %v61
    %v64 = vmul.f32 %v62, %v62
    %v65 = vld [vmem:[#allocation7] sm:$0xff]
    %v66 = vadd.f32 %v63, %v64
    %v67 = vadd.f32 %v65, %v66
    %68 = vst [vmem:[#allocation7] sm:$0xff] %v67
    // Predicated region
    $region22: #{tpu_custom_call.1} parent=1 // pred_check
      _
    $region23: #{tpu_custom_call.1} parent=1 // pred_check_branch
      %70 = sbr.rel (0) target = $region25
    $region24: #{tpu_custom_call.1} parent=1 // pred_region
      %s72 = ssub.s32 128, 128
      %73 = vsyncadd [#allocation4], %s72
      %s75 = sshll.u32 [#allocation7], 4
      %s76 = int_to_ptr.vmem [resolvable:$true] %s75
      %78 = dma.vmem_to_hbm [thread:$0]  %s76, 128, %s2, [#allocation4]
    $region25: #{tpu_custom_call.1} parent=1 // pred_fallthru
      _
    // Predicated region
    $region26: #{tpu_custom_call.1} parent=1 // pred_check
      _
    $region27: #{tpu_custom_call.1} parent=1 // pred_check_branch
      %80 = sbr.rel (0) target = $region29
    $region28: #{tpu_custom_call.1} parent=1 // pred_region
      %81 = dma.done [#allocation4], 128
    $region29: #{tpu_custom_call.1} parent=1 // pred_fallthru
      _
    %82 = vsyncpa [#allocation3], 1
    %83 = vsyncpa [#allocation6], 1
    %84 = vsyncpa [#allocation4], 1

</llo_original>
